<compile_context>
chip_gen: v7x
topology: tpu7x:2x2x1
jax: 0.10.0
libtpu: 0.0.40
codegen_flags: <defaults>
</compile_context>

<pallas_src>
import jax
import jax.numpy as jnp
from jax.experimental import pallas as pl
from jax.experimental.pallas import tpu as pltpu


def _round_up(x, m):
    return ((x + m - 1) // m) * m


def _default_row_shards():
    """2 shards only on multi-TensorCore chips (v7x); 1 on v5e/v6e."""
    try:
        kind = jax.devices()[0].device_kind.lower()
    except Exception:  # pragma: no cover - defensive
        return 1
    return 2 if "v7" in kind else 1


def _make_fused_kernel(steps, compute_dtype):
    """Build the fused loss kernel for a fixed (static) number of reduction steps."""
    cdt = compute_dtype

    if steps == 1:
        # Degenerate reduction: skip the VMEM accumulator entirely and store the
        # shard partial directly (avoids a pointless (tp, Q) load+store pass).
        def kernel(x_ref, b_ref, a_ref, c_ref, o_ref):
            xb = jnp.dot(
                x_ref[...].astype(cdt), b_ref[...].astype(cdt),
                preferred_element_type=jnp.float32,
            ).astype(cdt)
            d = jnp.dot(
                a_ref[...].astype(cdt), xb, preferred_element_type=jnp.float32
            ) - c_ref[...]
            o_ref[...] = jnp.broadcast_to(jnp.sum(d * d), o_ref.shape)

        return kernel

    def kernel(x_ref, b_ref, a_ref, c_ref, o_ref, xb_ref, acc_ref):
        i = pl.program_id(1)  # reduction axis: row tiles within this shard

        @pl.when(i == 0)
        def _prologue():
            # Fused XB = X @ B: computed once per shard (2*M*N*Q flops, negligible
            # vs 2*P*M*Q) and kept resident in VMEM scratch — no HBM round trip.
            xb_ref[...] = jnp.dot(
                x_ref[...].astype(cdt), b_ref[...].astype(cdt),
                preferred_element_type=jnp.float32,
            ).astype(xb_ref.dtype)
            acc_ref[...] = jnp.zeros_like(acc_ref)

        # Single MXU matmul per row tile: (tp, M) @ (M, Q), f32 accumulation.
        d = jnp.dot(
            a_ref[...].astype(cdt), xb_ref[...], preferred_element_type=jnp.float32
        ) - c_ref[...]
        # Lane-dense VPU accumulation; no per-step cross-lane reduction.
        acc_ref[...] += d * d

        @pl.when(i == steps - 1)
        def _finalize():
            # One XLU reduction per shard; broadcast into a lane-dense (8, 128)
            # slab so the store is a full-tile unmasked vst (no (1,1) block).
            o_ref[...] = jnp.broadcast_to(jnp.sum(acc_ref[...]), o_ref.shape)

    return kernel


def matrix_quadratic_loss(A, X, B, C, *, tp=None, row_shards=None,
                          use_bf16_matmul=True):
    """0.5 * ||A @ X @ B - C||_F^2 (scalar, f32) via one fused Pallas kernel."""
    P, M = A.shape
    Mx, N = X.shape
    Nb, Q = B.shape
    assert M == Mx and N == Nb and C.shape == (P, Q)

    if row_shards is None:
        row_shards = _default_row_shards()
    row_shards = max(int(row_shards), 1)

    # Row tiling: cap tp at 256 so each shard has >=2 reduction steps to hide
    # A/C DMAs behind compute (per-step overhead ~0.35 us is negligible), and
    # pad ragged row counts with zero rows (they contribute (0-0)^2 = 0).
    rows_per_shard = -(-P // row_shards)
    if tp is None:
        tp = min(256, _round_up(rows_per_shard, 8))
    tp = _round_up(int(tp), 8)
    steps = -(-rows_per_shard // tp)
    padded_P = row_shards * steps * tp
    if padded_P != P:
        pad = padded_P - P
        A = jnp.pad(A, ((0, pad), (0, 0)))
        C = jnp.pad(C, ((0, pad), (0, 0)))

    cdt = jnp.bfloat16 if use_bf16_matmul else jnp.float32
    kernel = _make_fused_kernel(steps, cdt)

    scratch_shapes = []
    if steps > 1:
        scratch_shapes = [
            pltpu.VMEM((M, Q), cdt),          # resident XB (single copy, no DMA)
            pltpu.VMEM((tp, Q), jnp.float32),  # lane-dense partial accumulator
        ]

    # Shard axis: CORE_PARALLEL actually splits the rows across TensorCores on
    # v7x (plain "parallel" does not change core assignment); single-TC chips
    # use row_shards == 1 so everything is just the sequential reduction loop.
    if row_shards > 1:
        dim_sems = (pltpu.CORE_PARALLEL, pltpu.ARBITRARY)
    else:
        dim_sems = (pltpu.ARBITRARY, pltpu.ARBITRARY)

    # Explicit scoped-VMEM limit with headroom for the default double buffers.
    xb_bytes = 2 if use_bf16_matmul else 4
    vmem_est = (
        2 * (M * N + N * Q) * 4          # resident X, B blocks (double-buffered)
        + 2 * (tp * M + tp * Q) * 4      # A / C tile double buffers
        + M * Q * xb_bytes               # XB scratch
        + (tp * Q * 4 if steps > 1 else 0)  # accumulator scratch
        + 2 * 8 * 128 * 4                # output slab
    )
    vmem_limit = int(min(max(int(1.5 * vmem_est), 32 * 1024 * 1024),
                         64 * 1024 * 1024))

    partial_slabs = pl.pallas_call(
        kernel,
        out_shape=jax.ShapeDtypeStruct((row_shards, 8, 128), jnp.float32),
        grid_spec=pltpu.PrefetchScalarGridSpec(
            num_scalar_prefetch=0,
            grid=(row_shards, steps),
            in_specs=[
                # X, B: constant index_map -> DMA'd once per core, stay resident.
                pl.BlockSpec((M, N), lambda p, i: (0, 0)),
                pl.BlockSpec((N, Q), lambda p, i: (0, 0)),
                # A, C: streamed row tiles.
                pl.BlockSpec((tp, M), lambda p, i: (p * steps + i, 0)),
                pl.BlockSpec((tp, Q), lambda p, i: (p * steps + i, 0)),
            ],
            # Lane-dense per-shard partial slab; wrapper reads [:, 0, 0].
            out_specs=pl.BlockSpec((1, 8, 128), lambda p, i: (p, 0, 0)),
            scratch_shapes=scratch_shapes,
        ),
        compiler_params=pltpu.CompilerParams(
            dimension_semantics=dim_sems,
            vmem_limit_bytes=vmem_limit,
        ),
        cost_estimate=pl.CostEstimate(
            flops=2 * row_shards * M * N * Q + (2 * M + 3) * padded_P * Q,
            transcendentals=0,
            bytes_accessed=4 * (M * N + N * Q + padded_P * (M + Q))
            + 4 * row_shards * 8 * 128,
        ),
    )(X, B, A, C)

    return 0.5 * jnp.sum(partial_slabs[:, 0, 0])


if __name__ == "__main__":
    # Shapes consistent with the module's forward:
    #   A: (P, M), X: (M, N) parameter, B: (N, Q), C: (P, Q)
    # P=2048 with the default tp=256 gives 8 reduction steps (exercises
    # init / accumulate / finalize and the software pipeline).
    P, M, N, Q = 2048, 256, 128, 128

    key = jax.random.PRNGKey(0)
    kx, ka, kb, kc = jax.random.split(key, 4)

    # Parameter init matching torch.empty(m, n).uniform_(-1, 1)
    X = jax.random.uniform(kx, (M, N), dtype=jnp.float32, minval=-1.0, maxval=1.0)
    A = jax.random.normal(ka, (P, M), dtype=jnp.float32)
    B = jax.random.normal(kb, (N, Q), dtype=jnp.float32)
    C = jax.random.normal(kc, (P, Q), dtype=jnp.float32)

    # High-precision f32 reference (same semantics as the PyTorch loss_fn).
    AXB = jnp.dot(jnp.dot(A, X, precision=jax.lax.Precision.HIGHEST), B,
                  precision=jax.lax.Precision.HIGHEST)
    ref = 0.5 * jnp.sum((AXB - C) ** 2)

    # 1) Default path: fused XB, bf16 MXU operands, f32 accumulation.
    loss = jax.block_until_ready(matrix_quadratic_loss(A, X, B, C))
    rel = abs(float(loss) - float(ref)) / max(abs(float(ref)), 1.0)
    assert rel < 1e-2, (float(loss), float(ref), rel)

    # 2) Strict-f32 operand path (closest to the f32 PyTorch numerics).
    loss_f32 = jax.block_until_ready(
        matrix_quadratic_loss(A, X, B, C, use_bf16_matmul=False))
    rel32 = abs(float(loss_f32) - float(ref)) / max(abs(float(ref)), 1.0)
    assert rel32 < 2e-3, (float(loss_f32), float(ref), rel32)

    # 3) Degenerate single-step path (tiny P -> steps == 1, direct-store kernel).
    P2 = 64
    A2, C2 = A[:P2], C[:P2]
    ref2 = 0.5 * jnp.sum((AXB[:P2] - C2) ** 2)
    loss2 = jax.block_until_ready(
        matrix_quadratic_loss(A2, X, B, C2, use_bf16_matmul=False))
    rel2 = abs(float(loss2) - float(ref2)) / max(abs(float(ref2)), 1.0)
    assert rel2 < 2e-3, (float(loss2), float(ref2), rel2)

    print("KERNEL_OK")
</pallas_src>

<mosaic_0001>
module attributes {stable_mosaic.version = 11 : i64} {
  func.func @kernel(%arg0: i32, %arg1: i32, %arg2: memref<256x128xf32, #tpu.memory_space<vmem>>, %arg3: memref<128x128xf32, #tpu.memory_space<vmem>>, %arg4: memref<256x256xf32, #tpu.memory_space<vmem>>, %arg5: memref<256x128xf32, #tpu.memory_space<vmem>>, %arg6: memref<1x8x128xf32, #tpu.memory_space<vmem>>, %arg7: memref<256x128xbf16, #tpu.memory_space<vmem>>, %arg8: memref<256x128xf32, #tpu.memory_space<vmem>>) attributes {dimension_semantics = [#tpu.dimension_semantics<arbitrary>, #tpu.dimension_semantics<arbitrary>], iteration_bounds = array<i64: 1, 8>, scalar_prefetch = 0 : i64, scratch_operands = 2 : i64, tpu.core_type = #tpu.core_type<tc>, window_params = [{pipeline_mode = #tpu.pipeline_mode<synchronous>, transform_indices = @transform_0, window_bounds = array<i64: 256, 128>}, {pipeline_mode = #tpu.pipeline_mode<synchronous>, transform_indices = @transform_1, window_bounds = array<i64: 128, 128>}, {transform_indices = @transform_2, window_bounds = array<i64: 256, 256>}, {transform_indices = @transform_3, window_bounds = array<i64: 256, 128>}, {transform_indices = @transform_4, window_bounds = array<i64: 1, 8, 128>}]} {
    %c0_i32 = arith.constant 0 : i32
    %0 = arith.cmpi eq, %arg1, %c0_i32 : i32
    %1 = arith.extui %0 : i1 to i32
    %c0_i32_0 = arith.constant 0 : i32
    %2 = arith.cmpi ne, %1, %c0_i32_0 : i32
    scf.if %2 {
      %c0_11 = arith.constant 0 : index
      %c0_12 = arith.constant 0 : index
      %16 = vector.load %arg2[%c0_11, %c0_12] : memref<256x128xf32, #tpu.memory_space<vmem>>, vector<256x128xf32>
      %17 = arith.truncf %16 : vector<256x128xf32> to vector<256x128xbf16>
      %c0_13 = arith.constant 0 : index
      %c0_14 = arith.constant 0 : index
      %18 = vector.load %arg3[%c0_13, %c0_14] : memref<128x128xf32, #tpu.memory_space<vmem>>, vector<128x128xf32>
      %19 = arith.truncf %18 : vector<128x128xf32> to vector<128x128xbf16>
      %cst_15 = arith.constant dense<0.000000e+00> : vector<256x128xf32>
      %20 = tpu.matmul %17, %19, %cst_15 {dimension_numbers = #tpu.dot_dimension_numbers<[1], [0], [0], [1], [0, 0, 1, 1], [], []>} : vector<256x128xbf16>, vector<128x128xbf16>, vector<256x128xf32> -> vector<256x128xf32>
      %21 = arith.truncf %20 : vector<256x128xf32> to vector<256x128xbf16>
      %c0_16 = arith.constant 0 : index
      %c0_17 = arith.constant 0 : index
      %22 = vector.load %arg7[%c0_16, %c0_17] : memref<256x128xbf16, #tpu.memory_space<vmem>>, vector<256x128xbf16>
      tpu.vector_store %arg7[%c0_16, %c0_17], %21 {strides = array<i32>} : memref<256x128xbf16, #tpu.memory_space<vmem>>, vector<256x128xbf16>,
      %cst_18 = arith.constant 0.000000e+00 : f32
      %23 = vector.broadcast %cst_18 : f32 to vector<256x128xf32>
      %c0_19 = arith.constant 0 : index
      %c0_20 = arith.constant 0 : index
      %24 = vector.load %arg8[%c0_19, %c0_20] : memref<256x128xf32, #tpu.memory_space<vmem>>, vector<256x128xf32>
      tpu.vector_store %arg8[%c0_19, %c0_20], %23 {strides = array<i32>} : memref<256x128xf32, #tpu.memory_space<vmem>>, vector<256x128xf32>,
    } else {
    }
    %c0 = arith.constant 0 : index
    %c0_1 = arith.constant 0 : index
    %3 = vector.load %arg4[%c0, %c0_1] : memref<256x256xf32, #tpu.memory_space<vmem>>, vector<256x256xf32>
    %4 = arith.truncf %3 : vector<256x256xf32> to vector<256x256xbf16>
    %c0_2 = arith.constant 0 : index
    %c0_3 = arith.constant 0 : index
    %5 = vector.load %arg7[%c0_2, %c0_3] : memref<256x128xbf16, #tpu.memory_space<vmem>>, vector<256x128xbf16>
    %cst = arith.constant dense<0.000000e+00> : vector<256x128xf32>
    %6 = tpu.matmul %4, %5, %cst {dimension_numbers = #tpu.dot_dimension_numbers<[1], [0], [0], [1], [0, 0, 1, 1], [], []>} : vector<256x256xbf16>, vector<256x128xbf16>, vector<256x128xf32> -> vector<256x128xf32>
    %c0_4 = arith.constant 0 : index
    %c0_5 = arith.constant 0 : index
    %7 = vector.load %arg5[%c0_4, %c0_5] : memref<256x128xf32, #tpu.memory_space<vmem>>, vector<256x128xf32>
    %8 = arith.subf %6, %7 : vector<256x128xf32>
    %c0_6 = arith.constant 0 : index
    %c0_7 = arith.constant 0 : index
    %9 = vector.load %arg8[%c0_6, %c0_7] : memref<256x128xf32, #tpu.memory_space<vmem>>, vector<256x128xf32>
    %10 = arith.mulf %8, %8 : vector<256x128xf32>
    %11 = arith.addf %9, %10 : vector<256x128xf32>
    %c0_8 = arith.constant 0 : index
    %c0_9 = arith.constant 0 : index
    %12 = vector.load %arg8[%c0_8, %c0_9] : memref<256x128xf32, #tpu.memory_space<vmem>>, vector<256x128xf32>
    tpu.vector_store %arg8[%c0_8, %c0_9], %11 {strides = array<i32>} : memref<256x128xf32, #tpu.memory_space<vmem>>, vector<256x128xf32>,
    %c7_i32 = arith.constant 7 : i32
    %13 = arith.cmpi eq, %arg1, %c7_i32 : i32
    %14 = arith.extui %13 : i1 to i32
    %c0_i32_10 = arith.constant 0 : i32
    %15 = arith.cmpi ne, %14, %c0_i32_10 : i32
    scf.if %15 {
      %c0_11 = arith.constant 0 : index
      %c0_12 = arith.constant 0 : index
      %16 = vector.load %arg8[%c0_11, %c0_12] : memref<256x128xf32, #tpu.memory_space<vmem>>, vector<256x128xf32>
      %17 = vector.shape_cast %16 : vector<256x128xf32> to vector<1x256x128xf32>
      %cst_13 = arith.constant dense<0.000000e+00> : vector<1xf32>
      %18 = vector.multi_reduction <add>, %17, %cst_13 [1, 2] : vector<1x256x128xf32> to vector<1xf32>
      %19 = vector.shape_cast %18 : vector<1xf32> to vector<1x1x1xf32>
      %20 = vector.extract %19[0, 0, 0] : f32 from vector<1x1x1xf32>
      %21 = vector.broadcast %20 : f32 to vector<1x8x128xf32>
      %c0_14 = arith.constant 0 : index
      %c0_15 = arith.constant 0 : index
      %c0_16 = arith.constant 0 : index
      %22 = vector.load %arg6[%c0_14, %c0_15, %c0_16] : memref<1x8x128xf32, #tpu.memory_space<vmem>>, vector<1x8x128xf32>
      tpu.vector_store %arg6[%c0_14, %c0_15, %c0_16], %21 {strides = array<i32>} : memref<1x8x128xf32, #tpu.memory_space<vmem>>, vector<1x8x128xf32>,
    } else {
    }
    return
  }
  func.func @transform_0(%arg0: i32, %arg1: i32) -> (i32, i32) {
    %c0_i32 = arith.constant 0 : i32
    %c0_i32_0 = arith.constant 0 : i32
    %c0_i32_1 = arith.constant 0 : i32
    return %c0_i32, %c0_i32_0 : i32, i32
  }
  func.func @transform_1(%arg0: i32, %arg1: i32) -> (i32, i32) {
    %c0_i32 = arith.constant 0 : i32
    %c0_i32_0 = arith.constant 0 : i32
    %c0_i32_1 = arith.constant 0 : i32
    return %c0_i32, %c0_i32_0 : i32, i32
  }
  func.func @transform_2(%arg0: i32, %arg1: i32) -> (i32, i32) {
    %c8_i32 = arith.constant 8 : i32
    %0 = arith.muli %arg0, %c8_i32 : i32
    %1 = arith.addi %0, %arg1 : i32
    %c0_i32 = arith.constant 0 : i32
    %c0_i32_0 = arith.constant 0 : i32
    return %1, %c0_i32 : i32, i32
  }
  func.func @transform_3(%arg0: i32, %arg1: i32) -> (i32, i32) {
    %c8_i32 = arith.constant 8 : i32
    %0 = arith.muli %arg0, %c8_i32 : i32
    %1 = arith.addi %0, %arg1 : i32
    %c0_i32 = arith.constant 0 : i32
    %c0_i32_0 = arith.constant 0 : i32
    return %1, %c0_i32 : i32, i32
  }
  func.func @transform_4(%arg0: i32, %arg1: i32) -> (i32, i32, i32) {
    %c0_i32 = arith.constant 0 : i32
    %c0_i32_0 = arith.constant 0 : i32
    %c0_i32_1 = arith.constant 0 : i32
    return %arg0, %c0_i32, %c0_i32_0 : i32, i32, i32
  }
}

</mosaic_0001>

<llo_original>
// kernel: tpu_custom_call.1
$region0: #{tpu_custom_call.1}
  #allocation0 [shape = 'u32[]', space=smem, size = 0x4, offset = 0x4, fixed_abs, tag = 'smem constant byte address 0x4 - core index']
  #allocation1 [shape = 'u32[144,128]{1,0:T(1,128)}', space=vmem, size = 0x12000, scoped, tag = 'internal scratch']
  #allocation2 [shape = 'bf16[256,128]{1,0:T(16,128)(2,1)}', space=vmem, size = 0x10000, scoped, tag = 'scratch operand']
  #allocation3 [shape = 'f32[256,128]{1,0:T(8,128)}', space=vmem, size = 0x20000, scoped, tag = 'scratch operand']
  %s0 = inlined_call_operand.hbm [shape: f32[256,128], index: 0, kind: input, shape index: {}]
  %s1 = inlined_call_operand.hbm [shape: f32[128,128], index: 1, kind: input, shape index: {}]
  %s2 = inlined_call_operand.hbm [shape: f32[2048,256], index: 2, kind: input, shape index: {}]
  %s3 = inlined_call_operand.hbm [shape: f32[2048,128], index: 3, kind: input, shape index: {}]
  %s4 = inlined_call_operand.hbm [shape: f32[1,8,128], index: 4, kind: output, shape index: {}]
  %s5 = sld [smem:[#allocation0]]
  $region73: #{tpu_custom_call.1} parent=0
    _
  %s7 = ssub.s32 1, %s5
  %s8 = scalar_select 0, %s7, %s5
  $region1: #{tpu_custom_call.1} parent=0
    #allocation4 [shape = 'u8[131072]{0}', space=vmem, size = 0x20000, scoped, tag = 'input window, operand 0, single buffered']
    #allocation5 [shape = 's32[2]{0}', space=sflag, size = 0x8, scoped, tag = 'scoped memory for tpu_custom_call.1']
    #allocation6 [shape = 's32[2]{0}', space=sflag, size = 0x8, scoped, tag = 'scoped memory for tpu_custom_call.1']
    #allocation7 [shape = 'u8[65536]{0}', space=vmem, size = 0x10000, scoped, tag = 'input window, operand 1, single buffered']
    #allocation8 [shape = 's32[1]{0}', space=sflag, size = 0x4, scoped, tag = 'scoped memory for tpu_custom_call.1']
    #allocation9 [shape = 'u8[524288]{0}', space=vmem, size = 0x80000, scoped, tag = 'input window, operand 2']
    #allocation10 [shape = 'u8[262144]{0}', space=vmem, size = 0x40000, scoped, tag = 'input window, operand 3']
    #allocation11 [shape = 'u8[4096]{0}', space=vmem, size = 0x1000, scoped, tag = 'output window, operand 0, single buffered']
    %9 = vsyncpa [#allocation5], 0
    %10 = vsyncpa [#allocation8], 0
    %11 = vsyncpa [#allocation6], 0
    loop: start=0, step=1, limit=10
    $region2: #{tpu_custom_call.1} parent=1 // loop_pre_header
      _
    $region3: #{tpu_custom_call.1} parent=1 // loop_header
      %s13 = sphi 0, %s17
      %p14 = scmp.ge.s32.totalorder %s13, 10
      %s20 = sphi 0, %s32
      %s21 = sphi 0, %s28
      %s22 = sphi 0, %s20
      %s23 = sphi 0, %s21
      %s24 = sphi 0, %s22
      %s25 = sphi 0, %s23
      %s33 = sphi 0, %s33
      %s35 = sphi 0, %s33
      %s36 = sphi 0, %s35
      %s50 = sphi 0, %s36
      %s54 = sphi 0, %s54
      %s56 = sphi 0, %s54
      %s57 = sphi 0, %s56
      %s71 = sphi 0, %s57
      %s81 = sphi 0, %s83
      %s84 = sphi 0, %s81
      %s85 = sphi 0, %s84
      %s101 = sphi 0, %s85
      %s111 = sphi 0, %s113
      %s114 = sphi 0, %s111
      %s115 = sphi 0, %s114
      %s131 = sphi 0, %s115
      %s137 = sphi 0, %s139
      %s140 = sphi 0, %s137
      %s141 = sphi 0, %s140
      %s157 = sphi 0, %s141
    $region4: #{tpu_custom_call.1} parent=1 // loop_header_branch
      %16 = sbr.rel (%p14) target = $region8
    $region5: #{tpu_custom_call.1} parent=1 // loop_body
      %s18 = ssub.s32 %s13, 1
      %s19 = ssub.s32 %s13, 2
      %s26 = sadd.s32 1, %s21
      %p27 = scmp.ge.s32.totalorder %s26, 8
      %s28 = scalar_select %p27, 0, %s26
      %s29 = sadd.s32 1, %s20
      %s30 = scalar_select %p27, %s29, %s20
      %p31 = scmp.ge.s32.totalorder %s30, 1
      %s32 = scalar_select %p31, 0, %s30
      %s34 = sadd.s32 %s33, 1
      %p37 = scmp.eq.s32.totalorder %s13, 7
      %p38 = scmp.ne.s32.totalorder %s33, %s35
      %p39 = scmp.eq.s32.totalorder %s13, 0
      %p40 = por %p38, %p39
      %p41 = scmp.ne.s32.totalorder %s33, %s35
      %p42 = scmp.eq.s32.totalorder %s18, 7
      %p43 = por %p41, %p42
      %p44 = scmp.ne.s32.totalorder %s35, %s36
      %p45 = scmp.eq.s32.totalorder %s18, 0
      %p46 = por %p44, %p45
      %p47 = scmp.ne.s32.totalorder %s35, %s36
      %p48 = scmp.eq.s32.totalorder %s19, 7
      %p49 = por %p47, %p48
      %p51 = scmp.ne.s32.totalorder %s36, %s50
      %p52 = scmp.eq.s32.totalorder %s19, 0
      %p53 = por %p51, %p52
      %s55 = sadd.s32 %s54, 1
      %p58 = scmp.eq.s32.totalorder %s13, 7
      %p59 = scmp.ne.s32.totalorder %s54, %s56
      %p60 = scmp.eq.s32.totalorder %s13, 0
      %p61 = por %p59, %p60
      %p62 = scmp.ne.s32.totalorder %s54, %s56
      %p63 = scmp.eq.s32.totalorder %s18, 7
      %p64 = por %p62, %p63
      %p65 = scmp.ne.s32.totalorder %s56, %s57
      %p66 = scmp.eq.s32.totalorder %s18, 0
      %p67 = por %p65, %p66
      %p68 = scmp.ne.s32.totalorder %s56, %s57
      %p69 = scmp.eq.s32.totalorder %s19, 7
      %p70 = por %p68, %p69
      %p72 = scmp.ne.s32.totalorder %s57, %s71
      %p73 = scmp.eq.s32.totalorder %s19, 0
      %p74 = por %p72, %p73
      %s75 = smul.u32 %s20, 8
      %s76 = sadd.s32 %s75, %s21
      %s77 = smul.u32 %s32, 8
      %s78 = sadd.s32 %s77, %s28
      %s79 = ssub.s32 %s76, %s78
      %p80 = scmp.eq.s32.totalorder %s79, 0
      %s82 = sadd.s32 %s81, 1
      %s83 = scalar_select %p80, %s81, %s82
      %p86 = pneg %p80
      %p87 = scmp.eq.s32.totalorder %s13, 7
      %p88 = por %p86, %p87
      %p89 = scmp.ne.s32.totalorder %s81, %s84
      %p90 = scmp.eq.s32.totalorder %s13, 0
      %p91 = por %p89, %p90
      %p92 = scmp.ne.s32.totalorder %s81, %s84
      %p93 = scmp.eq.s32.totalorder %s18, 7
      %p94 = por %p92, %p93
      %p95 = scmp.ne.s32.totalorder %s84, %s85
      %p96 = scmp.eq.s32.totalorder %s18, 0
      %p97 = por %p95, %p96
      %p98 = scmp.ne.s32.totalorder %s84, %s85
      %p99 = scmp.eq.s32.totalorder %s19, 7
      %p100 = por %p98, %p99
      %p102 = scmp.ne.s32.totalorder %s85, %s101
      %p103 = scmp.eq.s32.totalorder %s19, 0
      %p104 = por %p102, %p103
      %s105 = smul.u32 %s20, 8
      %s106 = sadd.s32 %s105, %s21
      %s107 = smul.u32 %s32, 8
      %s108 = sadd.s32 %s107, %s28
      %s109 = ssub.s32 %s106, %s108
      %p110 = scmp.eq.s32.totalorder %s109, 0
      %s112 = sadd.s32 %s111, 1
      %s113 = scalar_select %p110, %s111, %s112
      %p116 = pneg %p110
      %p117 = scmp.eq.s32.totalorder %s13, 7
      %p118 = por %p116, %p117
      %p119 = scmp.ne.s32.totalorder %s111, %s114
      %p120 = scmp.eq.s32.totalorder %s13, 0
      %p121 = por %p119, %p120
      %p122 = scmp.ne.s32.totalorder %s111, %s114
      %p123 = scmp.eq.s32.totalorder %s18, 7
      %p124 = por %p122, %p123
      %p125 = scmp.ne.s32.totalorder %s114, %s115
      %p126 = scmp.eq.s32.totalorder %s18, 0
      %p127 = por %p125, %p126
      %p128 = scmp.ne.s32.totalorder %s114, %s115
      %p129 = scmp.eq.s32.totalorder %s19, 7
      %p130 = por %p128, %p129
      %p132 = scmp.ne.s32.totalorder %s115, %s131
      %p133 = scmp.eq.s32.totalorder %s19, 0
      %p134 = por %p132, %p133
      %s135 = ssub.s32 %s20, %s32
      %p136 = scmp.eq.s32.totalorder %s135, 0
      %s138 = sadd.s32 %s137, 1
      %s139 = scalar_select %p136, %s137, %s138
      %p142 = pneg %p136
      %p143 = scmp.eq.s32.totalorder %s13, 7
      %p144 = por %p142, %p143
      %p145 = scmp.ne.s32.totalorder %s137, %s140
      %p146 = scmp.eq.s32.totalorder %s13, 0
      %p147 = por %p145, %p146
      %p148 = scmp.ne.s32.totalorder %s137, %s140
      %p149 = scmp.eq.s32.totalorder %s18, 7
      %p150 = por %p148, %p149
      %p151 = scmp.ne.s32.totalorder %s140, %s141
      %p152 = scmp.eq.s32.totalorder %s18, 0
      %p153 = por %p151, %p152
      %p154 = scmp.ne.s32.totalorder %s140, %s141
      %p155 = scmp.eq.s32.totalorder %s19, 7
      %p156 = por %p154, %p155
      %p158 = scmp.ne.s32.totalorder %s141, %s157
      %p159 = scmp.eq.s32.totalorder %s19, 0
      %p160 = por %p158, %p159
      %p161 = scmp.le.s32.totalorder 1, %s13
      %p162 = scmp.lt.s32.totalorder %s13, 9
      %p163 = pnand %p161, %p162
      %p164 = pneg %p163
      // Predicated region
      $region9: #{tpu_custom_call.1} parent=5 // pred_check
        _
      $region10: #{tpu_custom_call.1} parent=5 // pred_check_branch
        %166 = sbr.rel (%p163) target = $region12
      $region11: #{tpu_custom_call.1} parent=5 // pred_region
        %s167 = ssub.s32 %s13, 1
        // Predicated region
        $region13: #{tpu_custom_call.1} parent=11 // pred_check
          %p168 = pneg %p46
        $region14: #{tpu_custom_call.1} parent=11 // pred_check_branch
          %170 = sbr.rel (%p168) target = $region16
        $region15: #{tpu_custom_call.1} parent=11 // pred_region
          %s172 = ssub.s32 4096, 4096
          %173 = vsyncadd [#allocation5], %s172
          %s174 = sshll.u32 [#allocation4], 4
          %s175 = int_to_ptr.vmem [resolvable:$true] %s174
          %180 = dma.hbm_to_vmem [thread:$0]  %s0, 4096, %s175, [#allocation5], 128, 128, 8
        $region16: #{tpu_custom_call.1} parent=11 // pred_fallthru
          _
        // Predicated region
        $region17: #{tpu_custom_call.1} parent=11 // pred_check
          %p181 = pneg %p67
        $region18: #{tpu_custom_call.1} parent=11 // pred_check_branch
          %183 = sbr.rel (%p181) target = $region20
        $region19: #{tpu_custom_call.1} parent=11 // pred_region
          %s185 = ssub.s32 2048, 2048
          %186 = vsyncadd [#allocation8], %s185
          %s187 = sshll.u32 [#allocation7], 4
          %s188 = int_to_ptr.vmem [resolvable:$true] %s187
          %193 = dma.hbm_to_vmem [thread:$0]  %s1, 2048, %s188, [#allocation8], 128, 128, 8
        $region20: #{tpu_custom_call.1} parent=11 // pred_fallthru
          _
      $region12: #{tpu_custom_call.1} parent=5 // pred_fallthru
        _
      %p194 = scmp.lt.s32.totalorder %s13, 8
      // Predicated region
      $region21: #{tpu_custom_call.1} parent=5 // pred_check
        %p195 = pneg %p194
      $region22: #{tpu_custom_call.1} parent=5 // pred_check_branch
        %197 = sbr.rel (%p195) target = $region24
      $region23: #{tpu_custom_call.1} parent=5 // pred_region
        // Predicated region
        $region25: #{tpu_custom_call.1} parent=23 // pred_check
          %p198 = pneg %p91
        $region26: #{tpu_custom_call.1} parent=23 // pred_check_branch
          %200 = sbr.rel (%p198) target = $region28
        $region27: #{tpu_custom_call.1} parent=23 // pred_region
          %s201 = sand.u32 %s13, 1
          %s202 = scalar_lea.sflag [#allocation5], %s201
          %s203 = sand.u32 %s81, 1
          %s204 = smul.addr %s203, 512
          %s205 = scalar_lea.vmem [#allocation9], %s204
          %s206 = smul.u32 %s20, 8
          %s207 = sadd.s32 %s206, %s21
          %s208 = smul.u32 32, %s207
          %s210 = ssub.s32 8192, 8192
          %211 = vsyncadd %s202, %s210
          %s212 = smul.addr %s208, 2
          %s213 = smul.addr %s212, 128
          %s214 = scalar_lea.hbm %s2, %s213
          %s215 = sshll.u32 %s205, 4
          %s216 = int_to_ptr.vmem [resolvable:$true] %s215
          %221 = dma.hbm_to_vmem [thread:$0]  %s214, 8192, %s216, %s202, 256, 256, 16
        $region28: #{tpu_custom_call.1} parent=23 // pred_fallthru
          _
        // Predicated region
        $region29: #{tpu_custom_call.1} parent=23 // pred_check
          %p222 = pneg %p121
        $region30: #{tpu_custom_call.1} parent=23 // pred_check_branch
          %224 = sbr.rel (%p222) target = $region32
        $region31: #{tpu_custom_call.1} parent=23 // pred_region
          %s225 = sand.u32 %s13, 1
          %s226 = scalar_lea.sflag [#allocation5], %s225
          %s227 = sand.u32 %s111, 1
          %s228 = smul.addr %s227, 256
          %s229 = scalar_lea.vmem [#allocation10], %s228
          %s230 = smul.u32 %s20, 8
          %s231 = sadd.s32 %s230, %s21
          %s232 = smul.u32 32, %s231
          %s234 = ssub.s32 4096, 4096
          %235 = vsyncadd %s226, %s234
          %s236 = smul.addr %s232, 128
          %s237 = scalar_lea.hbm %s3, %s236
          %s238 = sshll.u32 %s229, 4
          %s239 = int_to_ptr.vmem [resolvable:$true] %s238
          %244 = dma.hbm_to_vmem [thread:$0]  %s237, 4096, %s239, %s226, 128, 128, 8
        $region32: #{tpu_custom_call.1} parent=23 // pred_fallthru
          _
      $region24: #{tpu_custom_call.1} parent=5 // pred_fallthru
        _
      %p245 = scmp.le.s32.totalorder 1, %s13
      %p246 = scmp.lt.s32.totalorder %s13, 9
      %p247 = pnand %p245, %p246
      %p248 = pneg %p247
      // Predicated region
      $region33: #{tpu_custom_call.1} parent=5 // pred_check
        _
      $region34: #{tpu_custom_call.1} parent=5 // pred_check_branch
        %250 = sbr.rel (%p247) target = $region36
      $region35: #{tpu_custom_call.1} parent=5 // pred_region
        %s251 = ssub.s32 %s13, 1
        // Predicated region
        $region37: #{tpu_custom_call.1} parent=35 // pred_check
          %p252 = pneg %p46
        $region38: #{tpu_custom_call.1} parent=35 // pred_check_branch
          %254 = sbr.rel (%p252) target = $region40
        $region39: #{tpu_custom_call.1} parent=35 // pred_region
          %255 = dma.done [#allocation5], 4096
        $region40: #{tpu_custom_call.1} parent=35 // pred_fallthru
          _
        // Predicated region
        $region41: #{tpu_custom_call.1} parent=35 // pred_check
          %p256 = pneg %p67
        $region42: #{tpu_custom_call.1} parent=35 // pred_check_branch
          %258 = sbr.rel (%p256) target = $region44
        $region43: #{tpu_custom_call.1} parent=35 // pred_region
          %259 = dma.done [#allocation8], 2048
        $region44: #{tpu_custom_call.1} parent=35 // pred_fallthru
          _
        %s260 = sand.u32 %s18, 1
        %s261 = scalar_lea.sflag [#allocation5], %s260
        %s262 = sand.u32 %s84, 1
        %s263 = smul.addr %s262, 512
        %s264 = scalar_lea.vmem [#allocation9], %s263
        // Predicated region
        $region45: #{tpu_custom_call.1} parent=35 // pred_check
          %p265 = pneg %p97
        $region46: #{tpu_custom_call.1} parent=35 // pred_check_branch
          %267 = sbr.rel (%p265) target = $region48
        $region47: #{tpu_custom_call.1} parent=35 // pred_region
          %268 = dma.done %s261, 8192
        $region48: #{tpu_custom_call.1} parent=35 // pred_fallthru
          _
        %s269 = sand.u32 %s18, 1
        %s270 = scalar_lea.sflag [#allocation5], %s269
        %s271 = sand.u32 %s114, 1
        %s272 = smul.addr %s271, 256
        %s273 = scalar_lea.vmem [#allocation10], %s272
        // Predicated region
        $region49: #{tpu_custom_call.1} parent=35 // pred_check
          %p274 = pneg %p127
        $region50: #{tpu_custom_call.1} parent=35 // pred_check_branch
          %276 = sbr.rel (%p274) target = $region52
        $region51: #{tpu_custom_call.1} parent=35 // pred_region
          %277 = dma.done %s270, 4096
        $region52: #{tpu_custom_call.1} parent=35 // pred_fallthru
          _
        %p278 = pneg %p46
        %p279 = pneg %p43
        %p280 = pneg %p67
        %p281 = pneg %p64
        %s282 = sand.u32 %s18, 1
        %s283 = scalar_lea.sflag [#allocation5], %s282
        %s284 = sand.u32 %s84, 1
        %s285 = smul.addr %s284, 512
        %s286 = scalar_lea.vmem [#allocation9], %s285
        %p287 = pneg %p97
        %p288 = pneg %p94
        %s289 = sand.u32 %s18, 1
        %s290 = scalar_lea.sflag [#allocation5], %s289
        %s291 = sand.u32 %s114, 1
        %s292 = smul.addr %s291, 256
        %s293 = scalar_lea.vmem [#allocation10], %s292
        %p294 = pneg %p127
        %p295 = pneg %p124
        %p296 = pneg %p153
        %p297 = pneg %p150
        %s298 = smul.u32 %s22, 8
        %s299 = sadd.s32 %s298, %s23
        %s300 = smul.u32 32, %s299
        %s301 = smul.u32 %s22, 8
        %s302 = sadd.s32 %s301, %s23
        %s303 = smul.u32 32, %s302
        %p305 = scmp.eq.s32.totalorder %s23, 0
        // Predicated region
        $region53: #{tpu_custom_call.1} parent=35 // pred_check
          %p306 = pneg %p305
        $region54: #{tpu_custom_call.1} parent=35 // pred_check_branch
          %308 = sbr.rel (%p306) target = $region56
        $region55: #{tpu_custom_call.1} parent=35 // pred_region
          %v309 = vld [vmem:[#allocation4] sm:$0xff]
          %v310 = vld [vmem:[#allocation4 + $0x8] sm:$0xff]
          %v311 = vld [vmem:[#allocation4 + $0x10] sm:$0xff]
          %v312 = vld [vmem:[#allocation4 + $0x18] sm:$0xff]
          %v313 = vld [vmem:[#allocation4 + $0x20] sm:$0xff]
          %v314 = vld [vmem:[#allocation4 + $0x28] sm:$0xff]
          %v315 = vld [vmem:[#allocation4 + $0x30] sm:$0xff]
          %v316 = vld [vmem:[#allocation4 + $0x38] sm:$0xff]
          %v317 = vld [vmem:[#allocation4 + $0x40] sm:$0xff]
          %v318 = vld [vmem:[#allocation4 + $0x48] sm:$0xff]
          %v319 = vld [vmem:[#allocation4 + $0x50] sm:$0xff]
          %v320 = vld [vmem:[#allocation4 + $0x58] sm:$0xff]
          %v321 = vld [vmem:[#allocation4 + $0x60] sm:$0xff]
          %v322 = vld [vmem:[#allocation4 + $0x68] sm:$0xff]
          %v323 = vld [vmem:[#allocation4 + $0x70] sm:$0xff]
          %v324 = vld [vmem:[#allocation4 + $0x78] sm:$0xff]
          %v325 = vld [vmem:[#allocation4 + $0x80] sm:$0xff]
          %v326 = vld [vmem:[#allocation4 + $0x88] sm:$0xff]
          %v327 = vld [vmem:[#allocation4 + $0x90] sm:$0xff]
          %v328 = vld [vmem:[#allocation4 + $0x98] sm:$0xff]
          %v329 = vld [vmem:[#allocation4 + $0xa0] sm:$0xff]
          %v330 = vld [vmem:[#allocation4 + $0xa8] sm:$0xff]
          %v331 = vld [vmem:[#allocation4 + $0xb0] sm:$0xff]
          %v332 = vld [vmem:[#allocation4 + $0xb8] sm:$0xff]
          %v333 = vld [vmem:[#allocation4 + $0xc0] sm:$0xff]
          %v334 = vld [vmem:[#allocation4 + $0xc8] sm:$0xff]
          %v335 = vld [vmem:[#allocation4 + $0xd0] sm:$0xff]
          %v336 = vld [vmem:[#allocation4 + $0xd8] sm:$0xff]
          %v337 = vld [vmem:[#allocation4 + $0xe0] sm:$0xff]
          %v338 = vld [vmem:[#allocation4 + $0xe8] sm:$0xff]
          %v339 = vld [vmem:[#allocation4 + $0xf0] sm:$0xff]
          %v340 = vld [vmem:[#allocation4 + $0xf8] sm:$0xff]
          %v341 = vpack.c.bf16 %v310, %v309
          %v342 = vpack.c.bf16 %v312, %v311
          %v343 = vpack.c.bf16 %v314, %v313
          %v344 = vpack.c.bf16 %v316, %v315
          %v345 = vpack.c.bf16 %v318, %v317
          %v346 = vpack.c.bf16 %v320, %v319
          %v347 = vpack.c.bf16 %v322, %v321
          %v348 = vpack.c.bf16 %v324, %v323
          %v349 = vpack.c.bf16 %v326, %v325
          %v350 = vpack.c.bf16 %v328, %v327
          %v351 = vpack.c.bf16 %v330, %v329
          %v352 = vpack.c.bf16 %v332, %v331
          %v353 = vpack.c.bf16 %v334, %v333
          %v354 = vpack.c.bf16 %v336, %v335
          %v355 = vpack.c.bf16 %v338, %v337
          %v356 = vpack.c.bf16 %v340, %v339
          %v357 = vld [vmem:[#allocation7] sm:$0xff]
          %v358 = vld [vmem:[#allocation7 + $0x8] sm:$0xff]
          %v359 = vld [vmem:[#allocation7 + $0x10] sm:$0xff]
          %v360 = vld [vmem:[#allocation7 + $0x18] sm:$0xff]
          %v361 = vld [vmem:[#allocation7 + $0x20] sm:$0xff]
          %v362 = vld [vmem:[#allocation7 + $0x28] sm:$0xff]
          %v363 = vld [vmem:[#allocation7 + $0x30] sm:$0xff]
          %v364 = vld [vmem:[#allocation7 + $0x38] sm:$0xff]
          %v365 = vld [vmem:[#allocation7 + $0x40] sm:$0xff]
          %v366 = vld [vmem:[#allocation7 + $0x48] sm:$0xff]
          %v367 = vld [vmem:[#allocation7 + $0x50] sm:$0xff]
          %v368 = vld [vmem:[#allocation7 + $0x58] sm:$0xff]
          %v369 = vld [vmem:[#allocation7 + $0x60] sm:$0xff]
          %v370 = vld [vmem:[#allocation7 + $0x68] sm:$0xff]
          %v371 = vld [vmem:[#allocation7 + $0x70] sm:$0xff]
          %v372 = vld [vmem:[#allocation7 + $0x78] sm:$0xff]
          %v373 = vpack.c.bf16 %v358, %v357
          %v374 = vpack.c.bf16 %v360, %v359
          %v375 = vpack.c.bf16 %v362, %v361
          %v376 = vpack.c.bf16 %v364, %v363
          %v377 = vpack.c.bf16 %v366, %v365
          %v378 = vpack.c.bf16 %v368, %v367
          %v379 = vpack.c.bf16 %v370, %v369
          %v380 = vpack.c.bf16 %v372, %v371
          %381 = vmatprep.subr.bf16.mxu0 0
          %382 = vmatpush1.bf16.msra.mxu0 %v373
          %383 = vmatprep.subr.bf16.mxu0 0
          %384 = vmatpush1.bf16.msra.mxu0 %v374
          %385 = vmatprep.subr.bf16.mxu0 0
          %386 = vmatpush1.bf16.msra.mxu0 %v375
          %387 = vmatprep.subr.bf16.mxu0 0
          %388 = vmatpush1.bf16.msra.mxu0 %v376
          %389 = vmatprep.subr.bf16.mxu0 0
          %390 = vmatpush1.bf16.msra.mxu0 %v377
          %391 = vmatprep.subr.bf16.mxu0 0
          %392 = vmatpush1.bf16.msra.mxu0 %v378
          %393 = vmatprep.subr.bf16.mxu0 0
          %394 = vmatpush1.bf16.msra.mxu0 %v379
          %395 = vmatprep.subr.bf16.mxu0 0
          %396 = vmatpush1.bf16.msra.mxu0 %v380
          %397 = vmatprep.subr.bf16.mxu0 0
          %398 = vmatpush1.bf16.msra.mxu0 0
          %399 = vmatprep.subr.bf16.mxu0 0
          %400 = vmatpush1.bf16.msra.mxu0 0
          %401 = vmatprep.subr.bf16.mxu0 0
          %402 = vmatpush1.bf16.msra.mxu0 0
          %403 = vmatprep.subr.bf16.mxu0 0
          %404 = vmatpush1.bf16.msra.mxu0 0
          %405 = vmatprep.subr.bf16.mxu0 0
          %406 = vmatpush1.bf16.msra.mxu0 0
          %407 = vmatprep.subr.bf16.mxu0 0
          %408 = vmatpush1.bf16.msra.mxu0 0
          %409 = vmatprep.subr.bf16.mxu0 0
          %410 = vmatpush1.bf16.msra.mxu0 0
          %411 = vmatprep.subr.bf16.mxu0 0
          %412 = vmatpush1.bf16.msra.mxu0 0
          %413 = vmatprep.mubr.bf16.mxu0 0
          %414 = vmatmul.mubr.bf16.gmra.mrb[0].mxu0 %v341
          %v415 = vpop.f32.mrb[0].mxu0
          %v416 = vadd.f32 0.0, %v415
          %v417 = vpop.f32.mrb[0].mxu0
          %v418 = vpop.f32.mrb[0].mxu0
          %v419 = vadd.f32 0.0, %v418
          %v420 = vpop.f32.mrb[0].mxu0
          %421 = vmatprep.mubr.bf16.mxu0 0
          %422 = vmatmul.mubr.bf16.gmra.mrb[0].mxu0 %v342
          %v423 = vpop.f32.mrb[0].mxu0
          %v424 = vadd.f32 0.0, %v423
          %v425 = vpop.f32.mrb[0].mxu0
          %v426 = vpop.f32.mrb[0].mxu0
          %v427 = vadd.f32 0.0, %v426
          %v428 = vpop.f32.mrb[0].mxu0
          %429 = vmatprep.mubr.bf16.mxu0 0
          %430 = vmatmul.mubr.bf16.gmra.mrb[0].mxu0 %v343
          %v431 = vpop.f32.mrb[0].mxu0
          %v432 = vadd.f32 0.0, %v431
          %v433 = vpop.f32.mrb[0].mxu0
          %v434 = vpop.f32.mrb[0].mxu0
          %v435 = vadd.f32 0.0, %v434
          %v436 = vpop.f32.mrb[0].mxu0
          %437 = vmatprep.mubr.bf16.mxu0 0
          %438 = vmatmul.mubr.bf16.gmra.mrb[0].mxu0 %v344
          %v439 = vpop.f32.mrb[0].mxu0
          %v440 = vadd.f32 0.0, %v439
          %v441 = vpop.f32.mrb[0].mxu0
          %v442 = vpop.f32.mrb[0].mxu0
          %v443 = vadd.f32 0.0, %v442
          %v444 = vpop.f32.mrb[0].mxu0
          %445 = vmatprep.mubr.bf16.mxu0 0
          %446 = vmatmul.mubr.bf16.gmra.mrb[0].mxu0 %v345
          %v447 = vpop.f32.mrb[0].mxu0
          %v448 = vadd.f32 0.0, %v447
          %v449 = vpop.f32.mrb[0].mxu0
          %v450 = vpop.f32.mrb[0].mxu0
          %v451 = vadd.f32 0.0, %v450
          %v452 = vpop.f32.mrb[0].mxu0
          %453 = vmatprep.mubr.bf16.mxu0 0
          %454 = vmatmul.mubr.bf16.gmra.mrb[0].mxu0 %v346
          %v455 = vpop.f32.mrb[0].mxu0
          %v456 = vadd.f32 0.0, %v455
          %v457 = vpop.f32.mrb[0].mxu0
          %v458 = vpop.f32.mrb[0].mxu0
          %v459 = vadd.f32 0.0, %v458
          %v460 = vpop.f32.mrb[0].mxu0
          %461 = vmatprep.mubr.bf16.mxu0 0
          %462 = vmatmul.mubr.bf16.gmra.mrb[0].mxu0 %v347
          %v463 = vpop.f32.mrb[0].mxu0
          %v464 = vadd.f32 0.0, %v463
          %v465 = vpop.f32.mrb[0].mxu0
          %v466 = vpop.f32.mrb[0].mxu0
          %v467 = vadd.f32 0.0, %v466
          %v468 = vpop.f32.mrb[0].mxu0
          %469 = vmatprep.mubr.bf16.mxu0 0
          %470 = vmatmul.mubr.bf16.gmra.mrb[0].mxu0 %v348
          %v471 = vpop.f32.mrb[0].mxu0
          %v472 = vadd.f32 0.0, %v471
          %v473 = vpop.f32.mrb[0].mxu0
          %v474 = vpop.f32.mrb[0].mxu0
          %v475 = vadd.f32 0.0, %v474
          %v476 = vpop.f32.mrb[0].mxu0
          %477 = vmatprep.mubr.bf16.mxu0 0
          %478 = vmatmul.mubr.bf16.gmra.mrb[0].mxu0 %v349
          %v479 = vpop.f32.mrb[0].mxu0
          %v480 = vadd.f32 0.0, %v479
          %v481 = vpop.f32.mrb[0].mxu0
          %v482 = vpop.f32.mrb[0].mxu0
          %v483 = vadd.f32 0.0, %v482
          %v484 = vpop.f32.mrb[0].mxu0
          %485 = vmatprep.mubr.bf16.mxu0 0
          %486 = vmatmul.mubr.bf16.gmra.mrb[0].mxu0 %v350
          %v487 = vpop.f32.mrb[0].mxu0
          %v488 = vadd.f32 0.0, %v487
          %v489 = vpop.f32.mrb[0].mxu0
          %v490 = vpop.f32.mrb[0].mxu0
          %v491 = vadd.f32 0.0, %v490
          %v492 = vpop.f32.mrb[0].mxu0
          %493 = vmatprep.mubr.bf16.mxu0 0
          %494 = vmatmul.mubr.bf16.gmra.mrb[0].mxu0 %v351
          %v495 = vpop.f32.mrb[0].mxu0
          %v496 = vadd.f32 0.0, %v495
          %v497 = vpop.f32.mrb[0].mxu0
          %v498 = vpop.f32.mrb[0].mxu0
          %v499 = vadd.f32 0.0, %v498
          %v500 = vpop.f32.mrb[0].mxu0
          %501 = vmatprep.mubr.bf16.mxu0 0
          %502 = vmatmul.mubr.bf16.gmra.mrb[0].mxu0 %v352
          %v503 = vpop.f32.mrb[0].mxu0
          %v504 = vadd.f32 0.0, %v503
          %v505 = vpop.f32.mrb[0].mxu0
          %v506 = vpop.f32.mrb[0].mxu0
          %v507 = vadd.f32 0.0, %v506
          %v508 = vpop.f32.mrb[0].mxu0
          %509 = vmatprep.mubr.bf16.mxu0 0
          %510 = vmatmul.mubr.bf16.gmra.mrb[0].mxu0 %v353
          %v511 = vpop.f32.mrb[0].mxu0
          %v512 = vadd.f32 0.0, %v511
          %v513 = vpop.f32.mrb[0].mxu0
          %v514 = vpop.f32.mrb[0].mxu0
          %v515 = vadd.f32 0.0, %v514
          %v516 = vpop.f32.mrb[0].mxu0
          %517 = vmatprep.mubr.bf16.mxu0 0
          %518 = vmatmul.mubr.bf16.gmra.mrb[0].mxu0 %v354
          %v519 = vpop.f32.mrb[0].mxu0
          %v520 = vadd.f32 0.0, %v519
          %v521 = vpop.f32.mrb[0].mxu0
          %v522 = vpop.f32.mrb[0].mxu0
          %v523 = vadd.f32 0.0, %v522
          %v524 = vpop.f32.mrb[0].mxu0
          %525 = vmatprep.mubr.bf16.mxu0 0
          %526 = vmatmul.mubr.bf16.gmra.mrb[0].mxu0 %v355
          %v527 = vpop.f32.mrb[0].mxu0
          %v528 = vadd.f32 0.0, %v527
          %v529 = vpop.f32.mrb[0].mxu0
          %v530 = vpop.f32.mrb[0].mxu0
          %v531 = vadd.f32 0.0, %v530
          %v532 = vpop.f32.mrb[0].mxu0
          %533 = vmatprep.mubr.bf16.mxu0 0
          %534 = vmatmul.mubr.bf16.gmra.mrb[0].mxu0 %v356
          %v535 = vpop.f32.mrb[0].mxu0
          %v536 = vadd.f32 0.0, %v535
          %v537 = vpop.f32.mrb[0].mxu0
          %v538 = vpop.f32.mrb[0].mxu0
          %v539 = vadd.f32 0.0, %v538
          %v540 = vpop.f32.mrb[0].mxu0
          %541 = vdwg.mxu0
          %v542 = vpack.c.bf16 %v419, %v416
          %v543 = vpack.c.bf16 %v427, %v424
          %v544 = vpack.c.bf16 %v435, %v432
          %v545 = vpack.c.bf16 %v443, %v440
          %v546 = vpack.c.bf16 %v451, %v448
          %v547 = vpack.c.bf16 %v459, %v456
          %v548 = vpack.c.bf16 %v467, %v464
          %v549 = vpack.c.bf16 %v475, %v472
          %v550 = vpack.c.bf16 %v483, %v480
          %v551 = vpack.c.bf16 %v491, %v488
          %v552 = vpack.c.bf16 %v499, %v496
          %v553 = vpack.c.bf16 %v507, %v504
          %v554 = vpack.c.bf16 %v515, %v512
          %v555 = vpack.c.bf16 %v523, %v520
          %v556 = vpack.c.bf16 %v531, %v528
          %v557 = vpack.c.bf16 %v539, %v536
          %558 = vst [vmem:[#allocation2] sm:$0xff] %v542
          %559 = vst [vmem:[#allocation2 + $0x8] sm:$0xff] %v543
          %560 = vst [vmem:[#allocation2 + $0x10] sm:$0xff] %v544
          %561 = vst [vmem:[#allocation2 + $0x18] sm:$0xff] %v545
          %562 = vst [vmem:[#allocation2 + $0x20] sm:$0xff] %v546
          %563 = vst [vmem:[#allocation2 + $0x28] sm:$0xff] %v547
          %564 = vst [vmem:[#allocation2 + $0x30] sm:$0xff] %v548
          %565 = vst [vmem:[#allocation2 + $0x38] sm:$0xff] %v549
          %566 = vst [vmem:[#allocation2 + $0x40] sm:$0xff] %v550
          %567 = vst [vmem:[#allocation2 + $0x48] sm:$0xff] %v551
          %568 = vst [vmem:[#allocation2 + $0x50] sm:$0xff] %v552
          %569 = vst [vmem:[#allocation2 + $0x58] sm:$0xff] %v553
          %570 = vst [vmem:[#allocation2 + $0x60] sm:$0xff] %v554
          %571 = vst [vmem:[#allocation2 + $0x68] sm:$0xff] %v555
          %572 = vst [vmem:[#allocation2 + $0x70] sm:$0xff] %v556
          %573 = vst [vmem:[#allocation2 + $0x78] sm:$0xff] %v557
          %574 = vst [vmem:[#allocation3] sm:$0xff] 0.0
          %575 = vst [vmem:[#allocation3 + $0x8] sm:$0xff] 0.0
          %576 = vst [vmem:[#allocation3 + $0x10] sm:$0xff] 0.0
          %577 = vst [vmem:[#allocation3 + $0x18] sm:$0xff] 0.0
          %578 = vst [vmem:[#allocation3 + $0x20] sm:$0xff] 0.0
          %579 = vst [vmem:[#allocation3 + $0x28] sm:$0xff] 0.0
          %580 = vst [vmem:[#allocation3 + $0x30] sm:$0xff] 0.0
          %581 = vst [vmem:[#allocation3 + $0x38] sm:$0xff] 0.0
          %582 = vst [vmem:[#allocation3 + $0x40] sm:$0xff] 0.0
          %583 = vst [vmem:[#allocation3 + $0x48] sm:$0xff] 0.0
          %584 = vst [vmem:[#allocation3 + $0x50] sm:$0xff] 0.0
          %585 = vst [vmem:[#allocation3 + $0x58] sm:$0xff] 0.0
          %586 = vst [vmem:[#allocation3 + $0x60] sm:$0xff] 0.0
          %587 = vst [vmem:[#allocation3 + $0x68] sm:$0xff] 0.0
          %588 = vst [vmem:[#allocation3 + $0x70] sm:$0xff] 0.0
          %589 = vst [vmem:[#allocation3 + $0x78] sm:$0xff] 0.0
          %590 = vst [vmem:[#allocation3 + $0x80] sm:$0xff] 0.0
          %591 = vst [vmem:[#allocation3 + $0x88] sm:$0xff] 0.0
          %592 = vst [vmem:[#allocation3 + $0x90] sm:$0xff] 0.0
          %593 = vst [vmem:[#allocation3 + $0x98] sm:$0xff] 0.0
          %594 = vst [vmem:[#allocation3 + $0xa0] sm:$0xff] 0.0
          %595 = vst [vmem:[#allocation3 + $0xa8] sm:$0xff] 0.0
          %596 = vst [vmem:[#allocation3 + $0xb0] sm:$0xff] 0.0
          %597 = vst [vmem:[#allocation3 + $0xb8] sm:$0xff] 0.0
          %598 = vst [vmem:[#allocation3 + $0xc0] sm:$0xff] 0.0
          %599 = vst [vmem:[#allocation3 + $0xc8] sm:$0xff] 0.0
          %600 = vst [vmem:[#allocation3 + $0xd0] sm:$0xff] 0.0
          %601 = vst [vmem:[#allocation3 + $0xd8] sm:$0xff] 0.0
          %602 = vst [vmem:[#allocation3 + $0xe0] sm:$0xff] 0.0
          %603 = vst [vmem:[#allocation3 + $0xe8] sm:$0xff] 0.0
          %604 = vst [vmem:[#allocation3 + $0xf0] sm:$0xff] 0.0
          %605 = vst [vmem:[#allocation3 + $0xf8] sm:$0xff] 0.0
        $region56: #{tpu_custom_call.1} parent=35 // pred_fallthru
          _
        %v606 = vld [vmem:[%s264] sm:$0xff]
        %v607 = vld [vmem:[%s264 + $0x8] sm:$0xff]
        %v608 = vld [vmem:[%s264 + $0x10] sm:$0xff]
        %v609 = vld [vmem:[%s264 + $0x18] sm:$0xff]
        %v610 = vld [vmem:[%s264 + $0x20] sm:$0xff]
        %v611 = vld [vmem:[%s264 + $0x28] sm:$0xff]
        %v612 = vld [vmem:[%s264 + $0x30] sm:$0xff]
        %v613 = vld [vmem:[%s264 + $0x38] sm:$0xff]
        %v614 = vld [vmem:[%s264 + $0x40] sm:$0xff]
        %v615 = vld [vmem:[%s264 + $0x48] sm:$0xff]
        %v616 = vld [vmem:[%s264 + $0x50] sm:$0xff]
        %v617 = vld [vmem:[%s264 + $0x58] sm:$0xff]
        %v618 = vld [vmem:[%s264 + $0x60] sm:$0xff]
        %v619 = vld [vmem:[%s264 + $0x68] sm:$0xff]
        %v620 = vld [vmem:[%s264 + $0x70] sm:$0xff]
        %v621 = vld [vmem:[%s264 + $0x78] sm:$0xff]
        %v622 = vld [vmem:[%s264 + $0x80] sm:$0xff]
        %v623 = vld [vmem:[%s264 + $0x88] sm:$0xff]
        %v624 = vld [vmem:[%s264 + $0x90] sm:$0xff]
        %v625 = vld [vmem:[%s264 + $0x98] sm:$0xff]
        %v626 = vld [vmem:[%s264 + $0xa0] sm:$0xff]
        %v627 = vld [vmem:[%s264 + $0xa8] sm:$0xff]
        %v628 = vld [vmem:[%s264 + $0xb0] sm:$0xff]
        %v629 = vld [vmem:[%s264 + $0xb8] sm:$0xff]
        %v630 = vld [vmem:[%s264 + $0xc0] sm:$0xff]
        %v631 = vld [vmem:[%s264 + $0xc8] sm:$0xff]
        %v632 = vld [vmem:[%s264 + $0xd0] sm:$0xff]
        %v633 = vld [vmem:[%s264 + $0xd8] sm:$0xff]
        %v634 = vld [vmem:[%s264 + $0xe0] sm:$0xff]
        %v635 = vld [vmem:[%s264 + $0xe8] sm:$0xff]
        %v636 = vld [vmem:[%s264 + $0xf0] sm:$0xff]
        %v637 = vld [vmem:[%s264 + $0xf8] sm:$0xff]
        %v638 = vld [vmem:[%s264 + $0x100] sm:$0xff]
        %v639 = vld [vmem:[%s264 + $0x108] sm:$0xff]
        %v640 = vld [vmem:[%s264 + $0x110] sm:$0xff]
        %v641 = vld [vmem:[%s264 + $0x118] sm:$0xff]
        %v642 = vld [vmem:[%s264 + $0x120] sm:$0xff]
        %v643 = vld [vmem:[%s264 + $0x128] sm:$0xff]
        %v644 = vld [vmem:[%s264 + $0x130] sm:$0xff]
        %v645 = vld [vmem:[%s264 + $0x138] sm:$0xff]
        %v646 = vld [vmem:[%s264 + $0x140] sm:$0xff]
        %v647 = vld [vmem:[%s264 + $0x148] sm:$0xff]
        %v648 = vld [vmem:[%s264 + $0x150] sm:$0xff]
        %v649 = vld [vmem:[%s264 + $0x158] sm:$0xff]
        %v650 = vld [vmem:[%s264 + $0x160] sm:$0xff]
        %v651 = vld [vmem:[%s264 + $0x168] sm:$0xff]
        %v652 = vld [vmem:[%s264 + $0x170] sm:$0xff]
        %v653 = vld [vmem:[%s264 + $0x178] sm:$0xff]
        %v654 = vld [vmem:[%s264 + $0x180] sm:$0xff]
        %v655 = vld [vmem:[%s264 + $0x188] sm:$0xff]
        %v656 = vld [vmem:[%s264 + $0x190] sm:$0xff]
        %v657 = vld [vmem:[%s264 + $0x198] sm:$0xff]
        %v658 = vld [vmem:[%s264 + $0x1a0] sm:$0xff]
        %v659 = vld [vmem:[%s264 + $0x1a8] sm:$0xff]
        %v660 = vld [vmem:[%s264 + $0x1b0] sm:$0xff]
        %v661 = vld [vmem:[%s264 + $0x1b8] sm:$0xff]
        %v662 = vld [vmem:[%s264 + $0x1c0] sm:$0xff]
        %v663 = vld [vmem:[%s264 + $0x1c8] sm:$0xff]
        %v664 = vld [vmem:[%s264 + $0x1d0] sm:$0xff]
        %v665 = vld [vmem:[%s264 + $0x1d8] sm:$0xff]
        %v666 = vld [vmem:[%s264 + $0x1e0] sm:$0xff]
        %v667 = vld [vmem:[%s264 + $0x1e8] sm:$0xff]
        %v668 = vld [vmem:[%s264 + $0x1f0] sm:$0xff]
        %v669 = vld [vmem:[%s264 + $0x1f8] sm:$0xff]
        %v670 = vpack.c.bf16 %v608, %v606
        %v671 = vpack.c.bf16 %v609, %v607
        %v672 = vpack.c.bf16 %v612, %v610
        %v673 = vpack.c.bf16 %v613, %v611
        %v674 = vpack.c.bf16 %v616, %v614
        %v675 = vpack.c.bf16 %v617, %v615
        %v676 = vpack.c.bf16 %v620, %v618
        %v677 = vpack.c.bf16 %v621, %v619
        %v678 = vpack.c.bf16 %v624, %v622
        %v679 = vpack.c.bf16 %v625, %v623
        %v680 = vpack.c.bf16 %v628, %v626
        %v681 = vpack.c.bf16 %v629, %v627
        %v682 = vpack.c.bf16 %v632, %v630
        %v683 = vpack.c.bf16 %v633, %v631
        %v684 = vpack.c.bf16 %v636, %v634
        %v685 = vpack.c.bf16 %v637, %v635
        %v686 = vpack.c.bf16 %v640, %v638
        %v687 = vpack.c.bf16 %v641, %v639
        %v688 = vpack.c.bf16 %v644, %v642
        %v689 = vpack.c.bf16 %v645, %v643
        %v690 = vpack.c.bf16 %v648, %v646
        %v691 = vpack.c.bf16 %v649, %v647
        %v692 = vpack.c.bf16 %v652, %v650
        %v693 = vpack.c.bf16 %v653, %v651
        %v694 = vpack.c.bf16 %v656, %v654
        %v695 = vpack.c.bf16 %v657, %v655
        %v696 = vpack.c.bf16 %v660, %v658
        %v697 = vpack.c.bf16 %v661, %v659
        %v698 = vpack.c.bf16 %v664, %v662
        %v699 = vpack.c.bf16 %v665, %v663
        %v700 = vpack.c.bf16 %v668, %v666
        %v701 = vpack.c.bf16 %v669, %v667
        %v702 = vld [vmem:[#allocation2] sm:$0xff]
        %v703 = vld [vmem:[#allocation2 + $0x8] sm:$0xff]
        %v704 = vld [vmem:[#allocation2 + $0x10] sm:$0xff]
        %v705 = vld [vmem:[#allocation2 + $0x18] sm:$0xff]
        %v706 = vld [vmem:[#allocation2 + $0x20] sm:$0xff]
        %v707 = vld [vmem:[#allocation2 + $0x28] sm:$0xff]
        %v708 = vld [vmem:[#allocation2 + $0x30] sm:$0xff]
        %v709 = vld [vmem:[#allocation2 + $0x38] sm:$0xff]
        %v710 = vld [vmem:[#allocation2 + $0x40] sm:$0xff]
        %v711 = vld [vmem:[#allocation2 + $0x48] sm:$0xff]
        %v712 = vld [vmem:[#allocation2 + $0x50] sm:$0xff]
        %v713 = vld [vmem:[#allocation2 + $0x58] sm:$0xff]
        %v714 = vld [vmem:[#allocation2 + $0x60] sm:$0xff]
        %v715 = vld [vmem:[#allocation2 + $0x68] sm:$0xff]
        %v716 = vld [vmem:[#allocation2 + $0x70] sm:$0xff]
        %v717 = vld [vmem:[#allocation2 + $0x78] sm:$0xff]
        %718 = vmatprep.subr.bf16.mxu0 0
        %719 = vmatpush1.bf16.msra.mxu0 %v702
        %720 = vmatprep.subr.bf16.mxu0 0
        %721 = vmatpush1.bf16.msra.mxu0 %v703
        %722 = vmatprep.subr.bf16.mxu0 0
        %723 = vmatpush1.bf16.msra.mxu0 %v704
        %724 = vmatprep.subr.bf16.mxu0 0
        %725 = vmatpush1.bf16.msra.mxu0 %v705
        %726 = vmatprep.subr.bf16.mxu0 0
        %727 = vmatpush1.bf16.msra.mxu0 %v706
        %728 = vmatprep.subr.bf16.mxu0 0
        %729 = vmatpush1.bf16.msra.mxu0 %v707
        %730 = vmatprep.subr.bf16.mxu0 0
        %731 = vmatpush1.bf16.msra.mxu0 %v708
        %732 = vmatprep.subr.bf16.mxu0 0
        %733 = vmatpush1.bf16.msra.mxu0 %v709
        %734 = vmatprep.subr.bf16.mxu0 0
        %735 = vmatpush1.bf16.msra.mxu0 %v710
        %736 = vmatprep.subr.bf16.mxu0 0
        %737 = vmatpush1.bf16.msra.mxu0 %v711
        %738 = vmatprep.subr.bf16.mxu0 0
        %739 = vmatpush1.bf16.msra.mxu0 %v712
        %740 = vmatprep.subr.bf16.mxu0 0
        %741 = vmatpush1.bf16.msra.mxu0 %v713
        %742 = vmatprep.subr.bf16.mxu0 0
        %743 = vmatpush1.bf16.msra.mxu0 %v714
        %744 = vmatprep.subr.bf16.mxu0 0
        %745 = vmatpush1.bf16.msra.mxu0 %v715
        %746 = vmatprep.subr.bf16.mxu0 0
        %747 = vmatpush1.bf16.msra.mxu0 %v716
        %748 = vmatprep.subr.bf16.mxu0 0
        %749 = vmatpush1.bf16.msra.mxu0 %v717
        %750 = vmatprep.mubr.bf16.mxu0 %v671
        %751 = vmatmul.mubr.bf16.gmra.mrb[0].mxu0 %v670
        %v752 = vpop.f32.mrb[0].mxu0
        %v753 = vadd.f32 0.0, %v752
        %v754 = vpop.f32.mrb[0].mxu0
        %v755 = vpop.f32.mrb[0].mxu0
        %v756 = vadd.f32 0.0, %v755
        %v757 = vpop.f32.mrb[0].mxu0
        %758 = vmatprep.mubr.bf16.mxu0 %v673
        %759 = vmatmul.mubr.bf16.gmra.mrb[0].mxu0 %v672
        %v760 = vpop.f32.mrb[0].mxu0
        %v761 = vadd.f32 0.0, %v760
        %v762 = vpop.f32.mrb[0].mxu0
        %v763 = vpop.f32.mrb[0].mxu0
        %v764 = vadd.f32 0.0, %v763
        %v765 = vpop.f32.mrb[0].mxu0
        %766 = vmatprep.mubr.bf16.mxu0 %v675
        %767 = vmatmul.mubr.bf16.gmra.mrb[0].mxu0 %v674
        %v768 = vpop.f32.mrb[0].mxu0
        %v769 = vadd.f32 0.0, %v768
        %v770 = vpop.f32.mrb[0].mxu0
        %v771 = vpop.f32.mrb[0].mxu0
        %v772 = vadd.f32 0.0, %v771
        %v773 = vpop.f32.mrb[0].mxu0
        %774 = vmatprep.mubr.bf16.mxu0 %v677
        %775 = vmatmul.mubr.bf16.gmra.mrb[0].mxu0 %v676
        %v776 = vpop.f32.mrb[0].mxu0
        %v777 = vadd.f32 0.0, %v776
        %v778 = vpop.f32.mrb[0].mxu0
        %v779 = vpop.f32.mrb[0].mxu0
        %v780 = vadd.f32 0.0, %v779
        %v781 = vpop.f32.mrb[0].mxu0
        %782 = vmatprep.mubr.bf16.mxu0 %v679
        %783 = vmatmul.mubr.bf16.gmra.mrb[0].mxu0 %v678
        %v784 = vpop.f32.mrb[0].mxu0
        %v785 = vadd.f32 0.0, %v784
        %v786 = vpop.f32.mrb[0].mxu0
        %v787 = vpop.f32.mrb[0].mxu0
        %v788 = vadd.f32 0.0, %v787
        %v789 = vpop.f32.mrb[0].mxu0
        %790 = vmatprep.mubr.bf16.mxu0 %v681
        %791 = vmatmul.mubr.bf16.gmra.mrb[0].mxu0 %v680
        %v792 = vpop.f32.mrb[0].mxu0
        %v793 = vadd.f32 0.0, %v792
        %v794 = vpop.f32.mrb[0].mxu0
        %v795 = vpop.f32.mrb[0].mxu0
        %v796 = vadd.f32 0.0, %v795
        %v797 = vpop.f32.mrb[0].mxu0
        %798 = vmatprep.mubr.bf16.mxu0 %v683
        %799 = vmatmul.mubr.bf16.gmra.mrb[0].mxu0 %v682
        %v800 = vpop.f32.mrb[0].mxu0
        %v801 = vadd.f32 0.0, %v800
        %v802 = vpop.f32.mrb[0].mxu0
        %v803 = vpop.f32.mrb[0].mxu0
        %v804 = vadd.f32 0.0, %v803
        %v805 = vpop.f32.mrb[0].mxu0
        %806 = vmatprep.mubr.bf16.mxu0 %v685
        %807 = vmatmul.mubr.bf16.gmra.mrb[0].mxu0 %v684
        %v808 = vpop.f32.mrb[0].mxu0
        %v809 = vadd.f32 0.0, %v808
        %v810 = vpop.f32.mrb[0].mxu0
        %v811 = vpop.f32.mrb[0].mxu0
        %v812 = vadd.f32 0.0, %v811
        %v813 = vpop.f32.mrb[0].mxu0
        %814 = vmatprep.mubr.bf16.mxu0 %v687
        %815 = vmatmul.mubr.bf16.gmra.mrb[0].mxu0 %v686
        %v816 = vpop.f32.mrb[0].mxu0
        %v817 = vadd.f32 0.0, %v816
        %v818 = vpop.f32.mrb[0].mxu0
        %v819 = vpop.f32.mrb[0].mxu0
        %v820 = vadd.f32 0.0, %v819
        %v821 = vpop.f32.mrb[0].mxu0
        %822 = vmatprep.mubr.bf16.mxu0 %v689
        %823 = vmatmul.mubr.bf16.gmra.mrb[0].mxu0 %v688
        %v824 = vpop.f32.mrb[0].mxu0
        %v825 = vadd.f32 0.0, %v824
        %v826 = vpop.f32.mrb[0].mxu0
        %v827 = vpop.f32.mrb[0].mxu0
        %v828 = vadd.f32 0.0, %v827
        %v829 = vpop.f32.mrb[0].mxu0
        %830 = vmatprep.mubr.bf16.mxu0 %v691
        %831 = vmatmul.mubr.bf16.gmra.mrb[0].mxu0 %v690
        %v832 = vpop.f32.mrb[0].mxu0
        %v833 = vadd.f32 0.0, %v832
        %v834 = vpop.f32.mrb[0].mxu0
        %v835 = vpop.f32.mrb[0].mxu0
        %v836 = vadd.f32 0.0, %v835
        %v837 = vpop.f32.mrb[0].mxu0
        %838 = vmatprep.mubr.bf16.mxu0 %v693
        %839 = vmatmul.mubr.bf16.gmra.mrb[0].mxu0 %v692
        %v840 = vpop.f32.mrb[0].mxu0
        %v841 = vadd.f32 0.0, %v840
        %v842 = vpop.f32.mrb[0].mxu0
        %v843 = vpop.f32.mrb[0].mxu0
        %v844 = vadd.f32 0.0, %v843
        %v845 = vpop.f32.mrb[0].mxu0
        %846 = vmatprep.mubr.bf16.mxu0 %v695
        %847 = vmatmul.mubr.bf16.gmra.mrb[0].mxu0 %v694
        %v848 = vpop.f32.mrb[0].mxu0
        %v849 = vadd.f32 0.0, %v848
        %v850 = vpop.f32.mrb[0].mxu0
        %v851 = vpop.f32.mrb[0].mxu0
        %v852 = vadd.f32 0.0, %v851
        %v853 = vpop.f32.mrb[0].mxu0
        %854 = vmatprep.mubr.bf16.mxu0 %v697
        %855 = vmatmul.mubr.bf16.gmra.mrb[0].mxu0 %v696
        %v856 = vpop.f32.mrb[0].mxu0
        %v857 = vadd.f32 0.0, %v856
        %v858 = vpop.f32.mrb[0].mxu0
        %v859 = vpop.f32.mrb[0].mxu0
        %v860 = vadd.f32 0.0, %v859
        %v861 = vpop.f32.mrb[0].mxu0
        %862 = vmatprep.mubr.bf16.mxu0 %v699
        %863 = vmatmul.mubr.bf16.gmra.mrb[0].mxu0 %v698
        %v864 = vpop.f32.mrb[0].mxu0
        %v865 = vadd.f32 0.0, %v864
        %v866 = vpop.f32.mrb[0].mxu0
        %v867 = vpop.f32.mrb[0].mxu0
        %v868 = vadd.f32 0.0, %v867
        %v869 = vpop.f32.mrb[0].mxu0
        %870 = vmatprep.mubr.bf16.mxu0 %v701
        %871 = vmatmul.mubr.bf16.gmra.mrb[0].mxu0 %v700
        %v872 = vpop.f32.mrb[0].mxu0
        %v873 = vadd.f32 0.0, %v872
        %v874 = vpop.f32.mrb[0].mxu0
        %v875 = vpop.f32.mrb[0].mxu0
        %v876 = vadd.f32 0.0, %v875
        %v877 = vpop.f32.mrb[0].mxu0
        %878 = vdwg.mxu0
        %v879 = vld [vmem:[%s273] sm:$0xff]
        %v880 = vld [vmem:[%s273 + $0x8] sm:$0xff]
        %v881 = vld [vmem:[%s273 + $0x10] sm:$0xff]
        %v882 = vld [vmem:[%s273 + $0x18] sm:$0xff]
        %v883 = vld [vmem:[%s273 + $0x20] sm:$0xff]
        %v884 = vld [vmem:[%s273 + $0x28] sm:$0xff]
        %v885 = vld [vmem:[%s273 + $0x30] sm:$0xff]
        %v886 = vld [vmem:[%s273 + $0x38] sm:$0xff]
        %v887 = vld [vmem:[%s273 + $0x40] sm:$0xff]
        %v888 = vld [vmem:[%s273 + $0x48] sm:$0xff]
        %v889 = vld [vmem:[%s273 + $0x50] sm:$0xff]
        %v890 = vld [vmem:[%s273 + $0x58] sm:$0xff]
        %v891 = vld [vmem:[%s273 + $0x60] sm:$0xff]
        %v892 = vld [vmem:[%s273 + $0x68] sm:$0xff]
        %v893 = vld [vmem:[%s273 + $0x70] sm:$0xff]
        %v894 = vld [vmem:[%s273 + $0x78] sm:$0xff]
        %v895 = vld [vmem:[%s273 + $0x80] sm:$0xff]
        %v896 = vld [vmem:[%s273 + $0x88] sm:$0xff]
        %v897 = vld [vmem:[%s273 + $0x90] sm:$0xff]
        %v898 = vld [vmem:[%s273 + $0x98] sm:$0xff]
        %v899 = vld [vmem:[%s273 + $0xa0] sm:$0xff]
        %v900 = vld [vmem:[%s273 + $0xa8] sm:$0xff]
        %v901 = vld [vmem:[%s273 + $0xb0] sm:$0xff]
        %v902 = vld [vmem:[%s273 + $0xb8] sm:$0xff]
        %v903 = vld [vmem:[%s273 + $0xc0] sm:$0xff]
        %v904 = vld [vmem:[%s273 + $0xc8] sm:$0xff]
        %v905 = vld [vmem:[%s273 + $0xd0] sm:$0xff]
        %v906 = vld [vmem:[%s273 + $0xd8] sm:$0xff]
        %v907 = vld [vmem:[%s273 + $0xe0] sm:$0xff]
        %v908 = vld [vmem:[%s273 + $0xe8] sm:$0xff]
        %v909 = vld [vmem:[%s273 + $0xf0] sm:$0xff]
        %v910 = vld [vmem:[%s273 + $0xf8] sm:$0xff]
        %v911 = vsub.f32 %v753, %v879
        %v912 = vsub.f32 %v756, %v880
        %v913 = vsub.f32 %v761, %v881
        %v914 = vsub.f32 %v764, %v882
        %v915 = vsub.f32 %v769, %v883
        %v916 = vsub.f32 %v772, %v884
        %v917 = vsub.f32 %v777, %v885
        %v918 = vsub.f32 %v780, %v886
        %v919 = vsub.f32 %v785, %v887
        %v920 = vsub.f32 %v788, %v888
        %v921 = vsub.f32 %v793, %v889
        %v922 = vsub.f32 %v796, %v890
        %v923 = vsub.f32 %v801, %v891
        %v924 = vsub.f32 %v804, %v892
        %v925 = vsub.f32 %v809, %v893
        %v926 = vsub.f32 %v812, %v894
        %v927 = vsub.f32 %v817, %v895
        %v928 = vsub.f32 %v820, %v896
        %v929 = vsub.f32 %v825, %v897
        %v930 = vsub.f32 %v828, %v898
        %v931 = vsub.f32 %v833, %v899
        %v932 = vsub.f32 %v836, %v900
        %v933 = vsub.f32 %v841, %v901
        %v934 = vsub.f32 %v844, %v902
        %v935 = vsub.f32 %v849, %v903
        %v936 = vsub.f32 %v852, %v904
        %v937 = vsub.f32 %v857, %v905
        %v938 = vsub.f32 %v860, %v906
        %v939 = vsub.f32 %v865, %v907
        %v940 = vsub.f32 %v868, %v908
        %v941 = vsub.f32 %v873, %v909
        %v942 = vsub.f32 %v876, %v910
        %v943 = vld [vmem:[#allocation3] sm:$0xff]
        %v944 = vld [vmem:[#allocation3 + $0x8] sm:$0xff]
        %v945 = vld [vmem:[#allocation3 + $0x10] sm:$0xff]
        %v946 = vld [vmem:[#allocation3 + $0x18] sm:$0xff]
        %v947 = vld [vmem:[#allocation3 + $0x20] sm:$0xff]
        %v948 = vld [vmem:[#allocation3 + $0x28] sm:$0xff]
        %v949 = vld [vmem:[#allocation3 + $0x30] sm:$0xff]
        %v950 = vld [vmem:[#allocation3 + $0x38] sm:$0xff]
        %v951 = vld [vmem:[#allocation3 + $0x40] sm:$0xff]
        %v952 = vld [vmem:[#allocation3 + $0x48] sm:$0xff]
        %v953 = vld [vmem:[#allocation3 + $0x50] sm:$0xff]
        %v954 = vld [vmem:[#allocation3 + $0x58] sm:$0xff]
        %v955 = vld [vmem:[#allocation3 + $0x60] sm:$0xff]
        %v956 = vld [vmem:[#allocation3 + $0x68] sm:$0xff]
        %v957 = vld [vmem:[#allocation3 + $0x70] sm:$0xff]
        %v958 = vld [vmem:[#allocation3 + $0x78] sm:$0xff]
        %v959 = vld [vmem:[#allocation3 + $0x80] sm:$0xff]
        %v960 = vld [vmem:[#allocation3 + $0x88] sm:$0xff]
        %v961 = vld [vmem:[#allocation3 + $0x90] sm:$0xff]
        %v962 = vld [vmem:[#allocation3 + $0x98] sm:$0xff]
        %v963 = vld [vmem:[#allocation3 + $0xa0] sm:$0xff]
        %v964 = vld [vmem:[#allocation3 + $0xa8] sm:$0xff]
        %v965 = vld [vmem:[#allocation3 + $0xb0] sm:$0xff]
        %v966 = vld [vmem:[#allocation3 + $0xb8] sm:$0xff]
        %v967 = vld [vmem:[#allocation3 + $0xc0] sm:$0xff]
        %v968 = vld [vmem:[#allocation3 + $0xc8] sm:$0xff]
        %v969 = vld [vmem:[#allocation3 + $0xd0] sm:$0xff]
        %v970 = vld [vmem:[#allocation3 + $0xd8] sm:$0xff]
        %v971 = vld [vmem:[#allocation3 + $0xe0] sm:$0xff]
        %v972 = vld [vmem:[#allocation3 + $0xe8] sm:$0xff]
        %v973 = vld [vmem:[#allocation3 + $0xf0] sm:$0xff]
        %v974 = vld [vmem:[#allocation3 + $0xf8] sm:$0xff]
        %v975 = vmul.f32 %v911, %v911
        %v976 = vmul.f32 %v912, %v912
        %v977 = vmul.f32 %v913, %v913
        %v978 = vmul.f32 %v914, %v914
        %v979 = vmul.f32 %v915, %v915
        %v980 = vmul.f32 %v916, %v916
        %v981 = vmul.f32 %v917, %v917
        %v982 = vmul.f32 %v918, %v918
        %v983 = vmul.f32 %v919, %v919
        %v984 = vmul.f32 %v920, %v920
        %v985 = vmul.f32 %v921, %v921
        %v986 = vmul.f32 %v922, %v922
        %v987 = vmul.f32 %v923, %v923
        %v988 = vmul.f32 %v924, %v924
        %v989 = vmul.f32 %v925, %v925
        %v990 = vmul.f32 %v926, %v926
        %v991 = vmul.f32 %v927, %v927
        %v992 = vmul.f32 %v928, %v928
        %v993 = vmul.f32 %v929, %v929
        %v994 = vmul.f32 %v930, %v930
        %v995 = vmul.f32 %v931, %v931
        %v996 = vmul.f32 %v932, %v932
        %v997 = vmul.f32 %v933, %v933
        %v998 = vmul.f32 %v934, %v934
        %v999 = vmul.f32 %v935, %v935
        %v1000 = vmul.f32 %v936, %v936
        %v1001 = vmul.f32 %v937, %v937
        %v1002 = vmul.f32 %v938, %v938
        %v1003 = vmul.f32 %v939, %v939
        %v1004 = vmul.f32 %v940, %v940
        %v1005 = vmul.f32 %v941, %v941
        %v1006 = vmul.f32 %v942, %v942
        %v1007 = vadd.f32 %v943, %v975
        %v1008 = vadd.f32 %v944, %v976
        %v1009 = vadd.f32 %v945, %v977
        %v1010 = vadd.f32 %v946, %v978
        %v1011 = vadd.f32 %v947, %v979
        %v1012 = vadd.f32 %v948, %v980
        %v1013 = vadd.f32 %v949, %v981
        %v1014 = vadd.f32 %v950, %v982
        %v1015 = vadd.f32 %v951, %v983
        %v1016 = vadd.f32 %v952, %v984
        %v1017 = vadd.f32 %v953, %v985
        %v1018 = vadd.f32 %v954, %v986
        %v1019 = vadd.f32 %v955, %v987
        %v1020 = vadd.f32 %v956, %v988
        %v1021 = vadd.f32 %v957, %v989
        %v1022 = vadd.f32 %v958, %v990
        %v1023 = vadd.f32 %v959, %v991
        %v1024 = vadd.f32 %v960, %v992
        %v1025 = vadd.f32 %v961, %v993
        %v1026 = vadd.f32 %v962, %v994
        %v1027 = vadd.f32 %v963, %v995
        %v1028 = vadd.f32 %v964, %v996
        %v1029 = vadd.f32 %v965, %v997
        %v1030 = vadd.f32 %v966, %v998
        %v1031 = vadd.f32 %v967, %v999
        %v1032 = vadd.f32 %v968, %v1000
        %v1033 = vadd.f32 %v969, %v1001
        %v1034 = vadd.f32 %v970, %v1002
        %v1035 = vadd.f32 %v971, %v1003
        %v1036 = vadd.f32 %v972, %v1004
        %v1037 = vadd.f32 %v973, %v1005
        %v1038 = vadd.f32 %v974, %v1006
        %1039 = vst [vmem:[#allocation3] sm:$0xff] %v1007
        %1040 = vst [vmem:[#allocation3 + $0x8] sm:$0xff] %v1008
        %1041 = vst [vmem:[#allocation3 + $0x10] sm:$0xff] %v1009
        %1042 = vst [vmem:[#allocation3 + $0x18] sm:$0xff] %v1010
        %1043 = vst [vmem:[#allocation3 + $0x20] sm:$0xff] %v1011
        %1044 = vst [vmem:[#allocation3 + $0x28] sm:$0xff] %v1012
        %1045 = vst [vmem:[#allocation3 + $0x30] sm:$0xff] %v1013
        %1046 = vst [vmem:[#allocation3 + $0x38] sm:$0xff] %v1014
        %1047 = vst [vmem:[#allocation3 + $0x40] sm:$0xff] %v1015
        %1048 = vst [vmem:[#allocation3 + $0x48] sm:$0xff] %v1016
        %1049 = vst [vmem:[#allocation3 + $0x50] sm:$0xff] %v1017
        %1050 = vst [vmem:[#allocation3 + $0x58] sm:$0xff] %v1018
        %1051 = vst [vmem:[#allocation3 + $0x60] sm:$0xff] %v1019
        %1052 = vst [vmem:[#allocation3 + $0x68] sm:$0xff] %v1020
        %1053 = vst [vmem:[#allocation3 + $0x70] sm:$0xff] %v1021
        %1054 = vst [vmem:[#allocation3 + $0x78] sm:$0xff] %v1022
        %1055 = vst [vmem:[#allocation3 + $0x80] sm:$0xff] %v1023
        %1056 = vst [vmem:[#allocation3 + $0x88] sm:$0xff] %v1024
        %1057 = vst [vmem:[#allocation3 + $0x90] sm:$0xff] %v1025
        %1058 = vst [vmem:[#allocation3 + $0x98] sm:$0xff] %v1026
        %1059 = vst [vmem:[#allocation3 + $0xa0] sm:$0xff] %v1027
        %1060 = vst [vmem:[#allocation3 + $0xa8] sm:$0xff] %v1028
        %1061 = vst [vmem:[#allocation3 + $0xb0] sm:$0xff] %v1029
        %1062 = vst [vmem:[#allocation3 + $0xb8] sm:$0xff] %v1030
        %1063 = vst [vmem:[#allocation3 + $0xc0] sm:$0xff] %v1031
        %1064 = vst [vmem:[#allocation3 + $0xc8] sm:$0xff] %v1032
        %1065 = vst [vmem:[#allocation3 + $0xd0] sm:$0xff] %v1033
        %1066 = vst [vmem:[#allocation3 + $0xd8] sm:$0xff] %v1034
        %1067 = vst [vmem:[#allocation3 + $0xe0] sm:$0xff] %v1035
        %1068 = vst [vmem:[#allocation3 + $0xe8] sm:$0xff] %v1036
        %1069 = vst [vmem:[#allocation3 + $0xf0] sm:$0xff] %v1037
        %1070 = vst [vmem:[#allocation3 + $0xf8] sm:$0xff] %v1038
        %p1071 = scmp.eq.s32.totalorder %s23, 7
        // Predicated region
        $region57: #{tpu_custom_call.1} parent=35 // pred_check
          %p1072 = pneg %p1071
        $region58: #{tpu_custom_call.1} parent=35 // pred_check_branch
          %1074 = sbr.rel (%p1072) target = $region60
        $region59: #{tpu_custom_call.1} parent=35 // pred_region
          %v1075 = vld [vmem:[#allocation3] sm:$0xff]
          %v1076 = vld [vmem:[#allocation3 + $0x8] sm:$0xff]
          %v1077 = vld [vmem:[#allocation3 + $0x10] sm:$0xff]
          %v1078 = vld [vmem:[#allocation3 + $0x18] sm:$0xff]
          %v1079 = vld [vmem:[#allocation3 + $0x20] sm:$0xff]
          %v1080 = vld [vmem:[#allocation3 + $0x28] sm:$0xff]
          %v1081 = vld [vmem:[#allocation3 + $0x30] sm:$0xff]
          %v1082 = vld [vmem:[#allocation3 + $0x38] sm:$0xff]
          %v1083 = vld [vmem:[#allocation3 + $0x40] sm:$0xff]
          %v1084 = vld [vmem:[#allocation3 + $0x48] sm:$0xff]
          %v1085 = vld [vmem:[#allocation3 + $0x50] sm:$0xff]
          %v1086 = vld [vmem:[#allocation3 + $0x58] sm:$0xff]
          %v1087 = vld [vmem:[#allocation3 + $0x60] sm:$0xff]
          %v1088 = vld [vmem:[#allocation3 + $0x68] sm:$0xff]
          %v1089 = vld [vmem:[#allocation3 + $0x70] sm:$0xff]
          %v1090 = vld [vmem:[#allocation3 + $0x78] sm:$0xff]
          %v1091 = vld [vmem:[#allocation3 + $0x80] sm:$0xff]
          %v1092 = vld [vmem:[#allocation3 + $0x88] sm:$0xff]
          %v1093 = vld [vmem:[#allocation3 + $0x90] sm:$0xff]
          %v1094 = vld [vmem:[#allocation3 + $0x98] sm:$0xff]
          %v1095 = vld [vmem:[#allocation3 + $0xa0] sm:$0xff]
          %v1096 = vld [vmem:[#allocation3 + $0xa8] sm:$0xff]
          %v1097 = vld [vmem:[#allocation3 + $0xb0] sm:$0xff]
          %v1098 = vld [vmem:[#allocation3 + $0xb8] sm:$0xff]
          %v1099 = vld [vmem:[#allocation3 + $0xc0] sm:$0xff]
          %v1100 = vld [vmem:[#allocation3 + $0xc8] sm:$0xff]
          %v1101 = vld [vmem:[#allocation3 + $0xd0] sm:$0xff]
          %v1102 = vld [vmem:[#allocation3 + $0xd8] sm:$0xff]
          %v1103 = vld [vmem:[#allocation3 + $0xe0] sm:$0xff]
          %v1104 = vld [vmem:[#allocation3 + $0xe8] sm:$0xff]
          %v1105 = vld [vmem:[#allocation3 + $0xf0] sm:$0xff]
          %v1106 = vld [vmem:[#allocation3 + $0xf8] sm:$0xff]
          %v1107 = vadd.f32 %v1075, %v1076
          %v1108 = vadd.f32 %v1107, %v1077
          %v1109 = vadd.f32 %v1108, %v1078
          %v1110 = vadd.f32 %v1109, %v1079
          %v1111 = vadd.f32 %v1110, %v1080
          %v1112 = vadd.f32 %v1111, %v1081
          %v1113 = vadd.f32 %v1112, %v1082
          %v1114 = vadd.f32 %v1113, %v1083
          %v1115 = vadd.f32 %v1114, %v1084
          %v1116 = vadd.f32 %v1115, %v1085
          %v1117 = vadd.f32 %v1116, %v1086
          %v1118 = vadd.f32 %v1117, %v1087
          %v1119 = vadd.f32 %v1118, %v1088
          %v1120 = vadd.f32 %v1119, %v1089
          %v1121 = vadd.f32 %v1120, %v1090
          %v1122 = vadd.f32 %v1121, %v1091
          %v1123 = vadd.f32 %v1122, %v1092
          %v1124 = vadd.f32 %v1123, %v1093
          %v1125 = vadd.f32 %v1124, %v1094
          %v1126 = vadd.f32 %v1125, %v1095
          %v1127 = vadd.f32 %v1126, %v1096
          %v1128 = vadd.f32 %v1127, %v1097
          %v1129 = vadd.f32 %v1128, %v1098
          %v1130 = vadd.f32 %v1129, %v1099
          %v1131 = vadd.f32 %v1130, %v1100
          %v1132 = vadd.f32 %v1131, %v1101
          %v1133 = vadd.f32 %v1132, %v1102
          %v1134 = vadd.f32 %v1133, %v1103
          %v1135 = vadd.f32 %v1134, %v1104
          %v1136 = vadd.f32 %v1135, %v1105
          %v1137 = vadd.f32 %v1136, %v1106
          %1138 = vadd.xlane.f32.xlu0 %v1137
          %v1139 = vpop.xlane.xlu0 %1138
          %v1140 = vrot.slane %v1139, 4
          %v1141 = vadd.f32 %v1139, %v1140
          %v1142 = vrot.slane %v1141, 2
          %v1143 = vadd.f32 %v1141, %v1142
          %v1144 = vrot.slane %v1143, 1
          %v1145 = vadd.f32 %v1143, %v1144
          %s1146 = vtos %v1145
          %v1147 = vstv %s1146
          %1148 = vst [vmem:[#allocation11] sm:$0xff] %v1147
        $region60: #{tpu_custom_call.1} parent=35 // pred_fallthru
          _
        // Predicated region
        $region61: #{tpu_custom_call.1} parent=35 // pred_check
          %p1149 = pneg %p150
        $region62: #{tpu_custom_call.1} parent=35 // pred_check_branch
          %1151 = sbr.rel (%p1149) target = $region64
        $region63: #{tpu_custom_call.1} parent=35 // pred_region
          %s1153 = ssub.s32 128, 128
          %1154 = vsyncadd [#allocation6], %s1153
          %s1155 = smul.addr %s22, 128
          %s1156 = scalar_lea.hbm %s4, %s1155
          %s1158 = sshll.u32 [#allocation11], 4
          %s1159 = int_to_ptr.vmem [resolvable:$true] %s1158
          %1161 = dma.vmem_to_hbm [thread:$0]  %s1159, 128, %s1156, [#allocation6]
        $region64: #{tpu_custom_call.1} parent=35 // pred_fallthru
          _
        // Predicated region
        $region65: #{tpu_custom_call.1} parent=35 // pred_check
          %p1162 = pneg %p150
        $region66: #{tpu_custom_call.1} parent=35 // pred_check_branch
          %1164 = sbr.rel (%p1162) target = $region68
        $region67: #{tpu_custom_call.1} parent=35 // pred_region
          %1165 = dma.done [#allocation6], 128
        $region68: #{tpu_custom_call.1} parent=35 // pred_fallthru
          _
      $region36: #{tpu_custom_call.1} parent=5 // pred_fallthru
        _
      %p1166 = scmp.le.s32.totalorder 2, %s13
      // Predicated region
      $region69: #{tpu_custom_call.1} parent=5 // pred_check
        %p1167 = pneg %p1166
      $region70: #{tpu_custom_call.1} parent=5 // pred_check_branch
        %1169 = sbr.rel (%p1167) target = $region72
      $region71: #{tpu_custom_call.1} parent=5 // pred_region
        %s1170 = ssub.s32 %s13, 2
      $region72: #{tpu_custom_call.1} parent=5 // pred_fallthru
        _
    $region6: #{tpu_custom_call.1} parent=1 // loop_footer
      %s17 = sadd.s32 1, %s13
    $region7: #{tpu_custom_call.1} parent=1 // loop_footer_branch
      %12 = sbr.rel target = $region3
    $region8: #{tpu_custom_call.1} parent=1 // loop_exit
      _
    %1171 = vsyncpa [#allocation5], 1
    %s1172 = scalar_lea.sflag [#allocation5], 1
    %1173 = vsyncpa %s1172, 1
    %1174 = vsyncpa [#allocation8], 1
    %1175 = vsyncpa [#allocation6], 1
    %s1176 = scalar_lea.sflag [#allocation6], 1
    %1177 = vsyncpa %s1176, 1

</llo_original>
